<compile_context>
chip_gen: v6e
topology: v6e:2x2x1
jax: 0.10.0
libtpu: 0.0.40
codegen_flags: <defaults>
</compile_context>

<pallas_src>
import jax
import jax.numpy as jnp
from jax.experimental import pallas as pl
from jax.experimental.pallas import tpu as pltpu

IN1, OUT1, OUT2 = 5, 3, 3  # Linear(5,3) -> ReLU -> Linear(3,3)


def mlp_kernel(x_ref, w1_ref, b1_ref, w2_ref, b2_ref, o_ref):
    # x_ref:  (5, TILE_B)  feature-major batch tile (batch on lanes)
    # w1_ref: (3, 5), b1_ref: (3, 1)  -- torch (out, in) layout, VMEM-resident
    # w2_ref: (3, 3), b2_ref: (3, 1)
    # o_ref:  (3, TILE_B)
    w1 = w1_ref[...]
    w2 = w2_ref[...]

    # Layer 1: h = W1 @ x^T + b1, unrolled VPU broadcast-MACs over K=5.
    # x rows are read per-k so the live working set stays a handful of vregs
    # per 128-lane strip even at 128K-wide tiles.
    h = b1_ref[...]                                   # (3, 1) lane-broadcast
    for k in range(IN1):
        h = h + w1[:, k:k + 1] * x_ref[k:k + 1, :]    # (3,1)*(1,TB) -> (3,TB)
    h = jnp.maximum(h, 0.0)                           # ReLU

    # Layer 2: y = W2 @ h + b2, unrolled over K=3.
    y = b2_ref[...]
    for k in range(OUT1):
        y = y + w2[:, k:k + 1] * h[k:k + 1, :]

    o_ref[...] = y.astype(o_ref.dtype)


def _round_up(n, m):
    return ((n + m - 1) // m) * m


def _choose_tile_b(B, tile_b):
    """Pick a lane-tile width: multiple of 128, no wider than the batch,
    and (when the batch allows) at least 2 grid steps so the parallel grid
    axis can use both TensorCores on v7x."""
    b128 = _round_up(max(B, 1), 128)
    tb = min(_round_up(tile_b, 128), b128)
    if b128 >= 256 and pl.cdiv(B, tb) < 2:
        tb = _round_up(b128 // 2, 128)
    return tb


def neural_network_forward_fm(xT, w1, b1, w2, b2, *, tile_b=131072):
    """Feature-major forward: xT (5, B) -> logits^T (3, B).

    No wrapper-side transposes or padding; this is the entry point to use when
    the surrounding model keeps activations (features, batch).
    Double-buffered VMEM footprint is 64*tile_b bytes (8 MiB at the default
    tile), safe under the default scoped-VMEM limit on v5e/v6e/v7x.
    """
    B = xT.shape[1]
    tb = _choose_tile_b(B, tile_b)
    n_tiles = pl.cdiv(B, tb)

    b1c = b1.reshape(OUT1, 1)
    b2c = b2.reshape(OUT2, 1)

    # Constant index_maps -> weights/biases DMA'd once, resident across tiles.
    const = lambda shape: pl.BlockSpec(shape, lambda i: (0,) * len(shape))

    yT = pl.pallas_call(
        mlp_kernel,
        out_shape=jax.ShapeDtypeStruct((OUT2, B), jnp.float32),
        grid=(n_tiles,),
        in_specs=[
            pl.BlockSpec((IN1, tb), lambda i: (0, i)),  # streamed x tiles
            const(w1.shape),
            const(b1c.shape),
            const(w2.shape),
            const(b2c.shape),
        ],
        out_specs=pl.BlockSpec((OUT2, tb), lambda i: (0, i)),
        compiler_params=pltpu.CompilerParams(
            dimension_semantics=("parallel",)),
        cost_estimate=pl.CostEstimate(
            flops=51 * B, transcendentals=0, bytes_accessed=32 * B),
    )(xT, w1, b1c, w2, b2c)
    return yT


def neural_network_forward(x, w1, b1, w2, b2, *, tile_b=131072):
    """Torch-layout convenience wrapper: x (B, 5) -> logits (B, 3).

    The two transposes here are boundary layout plumbing only; in a
    feature-major pipeline call neural_network_forward_fm directly and they
    disappear (the kernel itself never transposes).
    """
    yT = neural_network_forward_fm(x.T, w1, b1, w2, b2, tile_b=tile_b)
    return yT.T


def init_params(key):
    """Deterministic init mimicking PyTorch nn.Linear U(-1/sqrt(fan_in), +)."""
    k1, k2, k3, k4 = jax.random.split(key, 4)
    bound1 = 1.0 / jnp.sqrt(float(IN1))
    w1 = jax.random.uniform(k1, (OUT1, IN1), jnp.float32, -bound1, bound1)
    b1 = jax.random.uniform(k2, (OUT1,), jnp.float32, -bound1, bound1)
    bound2 = 1.0 / jnp.sqrt(float(OUT1))
    w2 = jax.random.uniform(k3, (OUT2, OUT1), jnp.float32, -bound2, bound2)
    b2 = jax.random.uniform(k4, (OUT2,), jnp.float32, -bound2, bound2)
    return w1, b1, w2, b2


if __name__ == "__main__":
    key = jax.random.PRNGKey(0)
    k_x, k_x2, k_p = jax.random.split(key, 3)
    w1, b1, w2, b2 = init_params(k_p)

    def ref_fwd(x):  # pure-JAX reference (torch layout: y = x @ W^T + b)
        return jnp.maximum(x @ w1.T + b1, 0.0) @ w2.T + b2

    # Small batch consistent with the module's (N, 5) input (torch.rand(1, 5)).
    x = jax.random.uniform(k_x, (2, IN1), jnp.float32)
    logits = neural_network_forward(x, w1, b1, w2, b2)
    jax.block_until_ready(logits)
    assert logits.shape == (2, OUT2)
    assert jnp.allclose(logits, ref_fwd(x), atol=1e-5, rtol=1e-5)

    # Ragged multi-tile path (exercises edge-block clipping + 2 grid steps).
    x2 = jax.random.uniform(k_x2, (300, IN1), jnp.float32)
    logits2 = neural_network_forward(x2, w1, b1, w2, b2)
    jax.block_until_ready(logits2)
    assert logits2.shape == (300, OUT2)
    assert jnp.allclose(logits2, ref_fwd(x2), atol=1e-5, rtol=1e-5)

    print("KERNEL_OK")
</pallas_src>

<mosaic_0001>
module attributes {stable_mosaic.version = 11 : i64} {
  func.func @mlp_kernel(%arg0: i32, %arg1: memref<5x128xf32, #tpu.memory_space<vmem>>, %arg2: memref<3x5xf32, #tpu.memory_space<vmem>>, %arg3: memref<3x1xf32, #tpu.memory_space<vmem>>, %arg4: memref<3x3xf32, #tpu.memory_space<vmem>>, %arg5: memref<3x1xf32, #tpu.memory_space<vmem>>, %arg6: memref<3x128xf32, #tpu.memory_space<vmem>>) attributes {dimension_semantics = [#tpu.dimension_semantics<parallel>], iteration_bounds = array<i64: 1>, scalar_prefetch = 0 : i64, scratch_operands = 0 : i64, tpu.core_type = #tpu.core_type<tc>, window_params = [{transform_indices = @transform_0, window_bounds = array<i64: 5, 128>}, {pipeline_mode = #tpu.pipeline_mode<synchronous>, transform_indices = @transform_1, window_bounds = array<i64: 3, 5>}, {pipeline_mode = #tpu.pipeline_mode<synchronous>, transform_indices = @transform_2, window_bounds = array<i64: 3, 1>}, {pipeline_mode = #tpu.pipeline_mode<synchronous>, transform_indices = @transform_3, window_bounds = array<i64: 3, 3>}, {pipeline_mode = #tpu.pipeline_mode<synchronous>, transform_indices = @transform_4, window_bounds = array<i64: 3, 1>}, {transform_indices = @transform_5, window_bounds = array<i64: 3, 128>}]} {
    %c0 = arith.constant 0 : index
    %c0_0 = arith.constant 0 : index
    %0 = vector.load %arg2[%c0, %c0_0] : memref<3x5xf32, #tpu.memory_space<vmem>>, vector<3x5xf32>
    %c0_1 = arith.constant 0 : index
    %c0_2 = arith.constant 0 : index
    %1 = vector.load %arg4[%c0_1, %c0_2] : memref<3x3xf32, #tpu.memory_space<vmem>>, vector<3x3xf32>
    %c0_3 = arith.constant 0 : index
    %c0_4 = arith.constant 0 : index
    %2 = vector.load %arg3[%c0_3, %c0_4] : memref<3x1xf32, #tpu.memory_space<vmem>>, vector<3x1xf32>
    %3 = vector.extract_strided_slice %0 {offsets = [0, 0], sizes = [3, 1], strides = [1, 1]} : vector<3x5xf32> to vector<3x1xf32>
    %c0_5 = arith.constant 0 : index
    %c0_6 = arith.constant 0 : index
    %4 = vector.load %arg1[%c0_5, %c0_6] : memref<5x128xf32, #tpu.memory_space<vmem>>, vector<1x128xf32>
    %5 = vector.broadcast %3 : vector<3x1xf32> to vector<3x128xf32>
    %6 = vector.broadcast %4 : vector<1x128xf32> to vector<3x128xf32>
    %7 = arith.mulf %5, %6 : vector<3x128xf32>
    %8 = vector.broadcast %2 : vector<3x1xf32> to vector<3x128xf32>
    %9 = arith.addf %8, %7 : vector<3x128xf32>
    %10 = vector.extract_strided_slice %0 {offsets = [0, 1], sizes = [3, 1], strides = [1, 1]} : vector<3x5xf32> to vector<3x1xf32>
    %c1 = arith.constant 1 : index
    %c0_7 = arith.constant 0 : index
    %11 = vector.load %arg1[%c1, %c0_7] : memref<5x128xf32, #tpu.memory_space<vmem>>, vector<1x128xf32>
    %12 = vector.broadcast %10 : vector<3x1xf32> to vector<3x128xf32>
    %13 = vector.broadcast %11 : vector<1x128xf32> to vector<3x128xf32>
    %14 = arith.mulf %12, %13 : vector<3x128xf32>
    %15 = arith.addf %9, %14 : vector<3x128xf32>
    %16 = vector.extract_strided_slice %0 {offsets = [0, 2], sizes = [3, 1], strides = [1, 1]} : vector<3x5xf32> to vector<3x1xf32>
    %c2 = arith.constant 2 : index
    %c0_8 = arith.constant 0 : index
    %17 = vector.load %arg1[%c2, %c0_8] : memref<5x128xf32, #tpu.memory_space<vmem>>, vector<1x128xf32>
    %18 = vector.broadcast %16 : vector<3x1xf32> to vector<3x128xf32>
    %19 = vector.broadcast %17 : vector<1x128xf32> to vector<3x128xf32>
    %20 = arith.mulf %18, %19 : vector<3x128xf32>
    %21 = arith.addf %15, %20 : vector<3x128xf32>
    %22 = vector.extract_strided_slice %0 {offsets = [0, 3], sizes = [3, 1], strides = [1, 1]} : vector<3x5xf32> to vector<3x1xf32>
    %c3 = arith.constant 3 : index
    %c0_9 = arith.constant 0 : index
    %23 = vector.load %arg1[%c3, %c0_9] : memref<5x128xf32, #tpu.memory_space<vmem>>, vector<1x128xf32>
    %24 = vector.broadcast %22 : vector<3x1xf32> to vector<3x128xf32>
    %25 = vector.broadcast %23 : vector<1x128xf32> to vector<3x128xf32>
    %26 = arith.mulf %24, %25 : vector<3x128xf32>
    %27 = arith.addf %21, %26 : vector<3x128xf32>
    %28 = vector.extract_strided_slice %0 {offsets = [0, 4], sizes = [3, 1], strides = [1, 1]} : vector<3x5xf32> to vector<3x1xf32>
    %c4 = arith.constant 4 : index
    %c0_10 = arith.constant 0 : index
    %29 = vector.load %arg1[%c4, %c0_10] : memref<5x128xf32, #tpu.memory_space<vmem>>, vector<1x128xf32>
    %30 = vector.broadcast %28 : vector<3x1xf32> to vector<3x128xf32>
    %31 = vector.broadcast %29 : vector<1x128xf32> to vector<3x128xf32>
    %32 = arith.mulf %30, %31 : vector<3x128xf32>
    %33 = arith.addf %27, %32 : vector<3x128xf32>
    %cst = arith.constant 0.000000e+00 : f32
    %34 = vector.broadcast %cst : f32 to vector<3x128xf32>
    %35 = arith.maximumf %33, %34 : vector<3x128xf32>
    %c0_11 = arith.constant 0 : index
    %c0_12 = arith.constant 0 : index
    %36 = vector.load %arg5[%c0_11, %c0_12] : memref<3x1xf32, #tpu.memory_space<vmem>>, vector<3x1xf32>
    %37 = vector.extract_strided_slice %1 {offsets = [0, 0], sizes = [3, 1], strides = [1, 1]} : vector<3x3xf32> to vector<3x1xf32>
    %38 = vector.extract_strided_slice %35 {offsets = [0, 0], sizes = [1, 128], strides = [1, 1]} : vector<3x128xf32> to vector<1x128xf32>
    %39 = vector.broadcast %37 : vector<3x1xf32> to vector<3x128xf32>
    %40 = vector.broadcast %38 : vector<1x128xf32> to vector<3x128xf32>
    %41 = arith.mulf %39, %40 : vector<3x128xf32>
    %42 = vector.broadcast %36 : vector<3x1xf32> to vector<3x128xf32>
    %43 = arith.addf %42, %41 : vector<3x128xf32>
    %44 = vector.extract_strided_slice %1 {offsets = [0, 1], sizes = [3, 1], strides = [1, 1]} : vector<3x3xf32> to vector<3x1xf32>
    %45 = vector.extract_strided_slice %35 {offsets = [1, 0], sizes = [1, 128], strides = [1, 1]} : vector<3x128xf32> to vector<1x128xf32>
    %46 = vector.broadcast %44 : vector<3x1xf32> to vector<3x128xf32>
    %47 = vector.broadcast %45 : vector<1x128xf32> to vector<3x128xf32>
    %48 = arith.mulf %46, %47 : vector<3x128xf32>
    %49 = arith.addf %43, %48 : vector<3x128xf32>
    %50 = vector.extract_strided_slice %1 {offsets = [0, 2], sizes = [3, 1], strides = [1, 1]} : vector<3x3xf32> to vector<3x1xf32>
    %51 = vector.extract_strided_slice %35 {offsets = [2, 0], sizes = [1, 128], strides = [1, 1]} : vector<3x128xf32> to vector<1x128xf32>
    %52 = vector.broadcast %50 : vector<3x1xf32> to vector<3x128xf32>
    %53 = vector.broadcast %51 : vector<1x128xf32> to vector<3x128xf32>
    %54 = arith.mulf %52, %53 : vector<3x128xf32>
    %55 = arith.addf %49, %54 : vector<3x128xf32>
    %c0_13 = arith.constant 0 : index
    %c0_14 = arith.constant 0 : index
    %56 = vector.load %arg6[%c0_13, %c0_14] : memref<3x128xf32, #tpu.memory_space<vmem>>, vector<3x128xf32>
    tpu.vector_store %arg6[%c0_13, %c0_14], %55 {strides = array<i32>} : memref<3x128xf32, #tpu.memory_space<vmem>>, vector<3x128xf32>,
    return
  }
  func.func @transform_0(%arg0: i32) -> (i32, i32) {
    %c0_i32 = arith.constant 0 : i32
    %c0_i32_0 = arith.constant 0 : i32
    return %c0_i32, %arg0 : i32, i32
  }
  func.func @transform_1(%arg0: i32) -> (i32, i32) {
    %c0_i32 = arith.constant 0 : i32
    %c0_i32_0 = arith.constant 0 : i32
    %c0_i32_1 = arith.constant 0 : i32
    return %c0_i32, %c0_i32_0 : i32, i32
  }
  func.func @transform_2(%arg0: i32) -> (i32, i32) {
    %c0_i32 = arith.constant 0 : i32
    %c0_i32_0 = arith.constant 0 : i32
    %c0_i32_1 = arith.constant 0 : i32
    return %c0_i32, %c0_i32_0 : i32, i32
  }
  func.func @transform_3(%arg0: i32) -> (i32, i32) {
    %c0_i32 = arith.constant 0 : i32
    %c0_i32_0 = arith.constant 0 : i32
    %c0_i32_1 = arith.constant 0 : i32
    return %c0_i32, %c0_i32_0 : i32, i32
  }
  func.func @transform_4(%arg0: i32) -> (i32, i32) {
    %c0_i32 = arith.constant 0 : i32
    %c0_i32_0 = arith.constant 0 : i32
    %c0_i32_1 = arith.constant 0 : i32
    return %c0_i32, %c0_i32_0 : i32, i32
  }
  func.func @transform_5(%arg0: i32) -> (i32, i32) {
    %c0_i32 = arith.constant 0 : i32
    %c0_i32_0 = arith.constant 0 : i32
    return %c0_i32, %arg0 : i32, i32
  }
}

</mosaic_0001>

<llo_original>
// kernel: tpu_custom_call.1
$region0: #{tpu_custom_call.1}
  #allocation0 [shape = 'u32[]', space=smem, size = 0x4, offset = 0x4, fixed_abs, tag = 'smem constant byte address 0x4 - core index']
  #allocation1 [shape = 'u32[144,128]{1,0:T(1,128)}', space=vmem, size = 0x12000, scoped, tag = 'internal scratch']
  %s0 = inlined_call_operand.vmem [shape: f32[5,2], index: 0, kind: input, shape index: {}]
  %s1 = inlined_call_operand.vmem [shape: f32[3,5], index: 1, kind: input, shape index: {}]
  %s2 = inlined_call_operand.vmem [shape: f32[3,1], index: 2, kind: input, shape index: {}]
  %s3 = inlined_call_operand.vmem [shape: f32[3,3], index: 3, kind: input, shape index: {}]
  %s4 = inlined_call_operand.vmem [shape: f32[3,1], index: 4, kind: input, shape index: {}]
  %s5 = inlined_call_operand.vmem [shape: f32[3,2], index: 5, kind: output, shape index: {}]
  %s6 = sld [smem:[#allocation0]]
  $region30: #{tpu_custom_call.1} parent=0
    _
  %s8 = ssub.s32 1, %s6
  %s9 = scalar_select 0, %s8, %s6
  // Predicated region
  $region2: #{tpu_custom_call.1} parent=0 // pred_check
    _
  $region3: #{tpu_custom_call.1} parent=0 // pred_check_branch
    %11 = sbr.rel (0) target = $region5
  $region4: #{tpu_custom_call.1} parent=0 // pred_region
    _
  $region5: #{tpu_custom_call.1} parent=0 // pred_fallthru
    _
  // Predicated region
  $region6: #{tpu_custom_call.1} parent=0 // pred_check
    _
  $region7: #{tpu_custom_call.1} parent=0 // pred_check_branch
    %13 = sbr.rel (0) target = $region9
  $region8: #{tpu_custom_call.1} parent=0 // pred_region
    _
  $region9: #{tpu_custom_call.1} parent=0 // pred_fallthru
    _
  // Predicated region
  $region10: #{tpu_custom_call.1} parent=0 // pred_check
    _
  $region11: #{tpu_custom_call.1} parent=0 // pred_check_branch
    %15 = sbr.rel (0) target = $region13
  $region12: #{tpu_custom_call.1} parent=0 // pred_region
    _
  $region13: #{tpu_custom_call.1} parent=0 // pred_fallthru
    _
  // Predicated region
  $region14: #{tpu_custom_call.1} parent=0 // pred_check
    _
  $region15: #{tpu_custom_call.1} parent=0 // pred_check_branch
    %17 = sbr.rel (0) target = $region17
  $region16: #{tpu_custom_call.1} parent=0 // pred_region
    _
  $region17: #{tpu_custom_call.1} parent=0 // pred_fallthru
    _
  // Predicated region
  $region18: #{tpu_custom_call.1} parent=0 // pred_check
    _
  $region19: #{tpu_custom_call.1} parent=0 // pred_check_branch
    %19 = sbr.rel (0) target = $region21
  $region20: #{tpu_custom_call.1} parent=0 // pred_region
    _
  $region21: #{tpu_custom_call.1} parent=0 // pred_fallthru
    _
  %v20 = vld [vmem:[%s1] sm:$0x7]
  %v21 = vld [vmem:[%s3] sm:$0x7]
  %v22 = vld [vmem:[%s2] sm:$0x7]
  %v23 = vld [vmem:[%s0] sm:$0x1]
  %25 = vset.pattern.permute.xlu0 0
  %26 = vperm.xlu0 %25, %v20
  %v27 = vpop.permute.xlu0 %26
  %v29 = vlaneseq
  %v30 = vshrl.u32 %v29, 7
  %v31 = vsub.s32 0, %v30
  %v32 = vrot.slane %v23, %v31
  %v33 = vmul.f32 %v27, %v32
  %35 = vset.pattern.permute.xlu0 0
  %36 = vperm.xlu0 %35, %v22
  %v37 = vpop.permute.xlu0 %36
  %v39 = vadd.f32 %v37, %v33
  %v40 = vld [vmem:[%s0 + $0x1] sm:$0x1]
  %41 = vset.pattern.permute.xlu0 1
  %42 = vperm.xlu0 %41, %v20
  %v43 = vpop.permute.xlu0 %42
  %v45 = vlaneseq
  %v46 = vshrl.u32 %v45, 7
  %v47 = vsub.s32 0, %v46
  %v48 = vrot.slane %v40, %v47
  %v49 = vmul.f32 %v43, %v48
  %v50 = vadd.f32 %v39, %v49
  %v51 = vld [vmem:[%s0 + $0x2] sm:$0x1]
  %52 = vset.pattern.permute.xlu0 2
  %53 = vperm.xlu0 %52, %v20
  %v54 = vpop.permute.xlu0 %53
  %v56 = vlaneseq
  %v57 = vshrl.u32 %v56, 7
  %v58 = vsub.s32 0, %v57
  %v59 = vrot.slane %v51, %v58
  %v60 = vmul.f32 %v54, %v59
  %v61 = vadd.f32 %v50, %v60
  %v62 = vld [vmem:[%s0 + $0x3] sm:$0x1]
  %63 = vset.pattern.permute.xlu0 3
  %64 = vperm.xlu0 %63, %v20
  %v65 = vpop.permute.xlu0 %64
  %v67 = vlaneseq
  %v68 = vshrl.u32 %v67, 7
  %v69 = vsub.s32 0, %v68
  %v70 = vrot.slane %v62, %v69
  %v71 = vmul.f32 %v65, %v70
  %v72 = vadd.f32 %v61, %v71
  %v73 = vld [vmem:[%s0 + $0x4] sm:$0x1]
  %74 = vset.pattern.permute.xlu0 4
  %75 = vperm.xlu0 %74, %v20
  %v76 = vpop.permute.xlu0 %75
  %v78 = vlaneseq
  %v79 = vshrl.u32 %v78, 7
  %v80 = vsub.s32 0, %v79
  %v81 = vrot.slane %v73, %v80
  %v82 = vmul.f32 %v76, %v81
  %v83 = vadd.f32 %v72, %v82
  %v84 = vmax.f32 %v83, 0.0
  %v85 = vld [vmem:[%s4] sm:$0x7]
  %87 = vset.pattern.permute.xlu0 0
  %88 = vperm.xlu0 %87, %v21
  %v89 = vpop.permute.xlu0 %88
  %v91 = vlaneseq
  %v92 = vshrl.u32 %v91, 7
  %v93 = vsub.s32 0, %v92
  %v94 = vrot.slane %v84, %v93
  %v95 = vmul.f32 %v89, %v94
  %97 = vset.pattern.permute.xlu0 0
  %98 = vperm.xlu0 %97, %v85
  %v99 = vpop.permute.xlu0 %98
  %v101 = vadd.f32 %v99, %v95
  %102 = vset.pattern.permute.xlu0 1
  %103 = vperm.xlu0 %102, %v21
  %v104 = vpop.permute.xlu0 %103
  %v106 = vlaneseq
  %v107 = vshrl.u32 %v106, 7
  %v108 = vsub.s32 1, %v107
  %v109 = vrot.slane %v84, %v108
  %v110 = vmul.f32 %v104, %v109
  %v111 = vadd.f32 %v101, %v110
  %112 = vset.pattern.permute.xlu0 2
  %113 = vperm.xlu0 %112, %v21
  %v114 = vpop.permute.xlu0 %113
  %v116 = vlaneseq
  %v117 = vshrl.u32 %v116, 7
  %v118 = vsub.s32 2, %v117
  %v119 = vrot.slane %v84, %v118
  %v120 = vmul.f32 %v114, %v119
  %v121 = vadd.f32 %v111, %v120
  %122 = vst [vmem:[%s5] sm:$0x7] %v121
  // Predicated region
  $region22: #{tpu_custom_call.1} parent=0 // pred_check
    _
  $region23: #{tpu_custom_call.1} parent=0 // pred_check_branch
    %124 = sbr.rel (0) target = $region25
  $region24: #{tpu_custom_call.1} parent=0 // pred_region
    _
  $region25: #{tpu_custom_call.1} parent=0 // pred_fallthru
    _
  // Predicated region
  $region26: #{tpu_custom_call.1} parent=0 // pred_check
    _
  $region27: #{tpu_custom_call.1} parent=0 // pred_check_branch
    %126 = sbr.rel (0) target = $region29
  $region28: #{tpu_custom_call.1} parent=0 // pred_region
    _
  $region29: #{tpu_custom_call.1} parent=0 // pred_fallthru
    _

</llo_original>
